<compile_context>
chip_gen: v6e
topology: v6e:2x2x1
jax: 0.10.0
libtpu: 0.0.40
codegen_flags: <defaults>
</compile_context>

<pallas_src>
import functools
import math

import jax
import jax.numpy as jnp
import numpy as np
from jax.experimental import pallas as pl
from jax.experimental.pallas import tpu as pltpu


NOISE_SCALE = 0.3        # self.ns in the PyTorch module
ACC_ROWS = 8             # sublane-aligned accumulator height
_MIB = 1024 * 1024


def _round_up(x, m):
    return (x + m - 1) // m * m


def _chip_config():
    """(nsplit, vmem_limit_bytes, stream_budget_bytes) per TPU generation."""
    try:
        kind = jax.devices()[0].device_kind.lower()
    except Exception:  # pragma: no cover - defensive
        kind = ""
    if "v7" in kind:                       # 2 TC/chip, 64 MiB VMEM per TC
        return 2, 48 * _MIB, 40 * _MIB
    if "v6" in kind:                       # 1 TC, 128 MiB VMEM
        return 1, 64 * _MIB, 48 * _MIB
    # v5e / unknown / interpret fallback: conservative.
    return 1, 32 * _MIB, 24 * _MIB


def _cvae_attack_kernel(n2_ref, mp_ref, logsp_ref,
                        z_ref, sum_ref, sumsq_ref,
                        *, rows, noise_scale, log_noise_scale):
    """Fused reparameterization + running per-lane (sum, sum^2) of n2.

    Grid = (nsplit "parallel", steps "arbitrary").  Each parallel slice
    accumulates directly into its (1, 8, T) stat output blocks (index_map is
    constant along the arbitrary axis, so the blocks stay VMEM-resident); the
    tiny cross-lane reduce happens in the wrapper.  Row-tail / redundant
    (clamped) blocks are masked so they contribute exactly 0 to the stats.
    """
    i = pl.program_id(1)

    @pl.when(i == 0)
    def _init():
        sum_ref[...] = jnp.zeros_like(sum_ref)
        sumsq_ref[...] = jnp.zeros_like(sumsq_ref)

    n2 = n2_ref[...].astype(jnp.float32)
    mp = mp_ref[...].astype(jnp.float32)
    logsp = logsp_ref[...].astype(jnp.float32)

    # z = m_p + n2 * exp(logs_p) * noise_scale  (how noise_2 enters tts.infer)
    if log_noise_scale is not None:
        scaled = jnp.exp(logsp + log_noise_scale)
    else:
        scaled = jnp.exp(logsp) * noise_scale
    z = mp + n2 * scaled
    z_ref[...] = z.astype(z_ref.dtype)          # OOB tail rows dropped by Pallas

    # torch.var_mean(n2, unbiased=False) partials: mask rows past the true row
    # count (ragged tail / clamped redundant blocks), then fold the (rt, T)
    # tile into sublane groups of 8 and accumulate elementwise (VPU only).
    rt_blk, t = n2.shape
    idx = pl.program_id(0) * pl.num_programs(1) + i          # unclamped block id
    row_start = idx * rt_blk
    rids = jax.lax.broadcasted_iota(jnp.int32, (rt_blk, t), 0)
    valid = (row_start + rids) < rows
    n2m = jnp.where(valid, n2, 0.0)

    grp = n2m.reshape(rt_blk // ACC_ROWS, ACC_ROWS, t)        # sublane-tile split
    sum_ref[0] += jnp.sum(grp, axis=0)
    sumsq_ref[0] += jnp.sum(grp * grp, axis=0)


def cvae_attack_forward(n2, m_p, logs_p, *, noise_scale=NOISE_SCALE):
    """Pallas implementation of the CVAE_Attack_Net forward hot path.

    Returns (loss_plus_reg, decoded_output, z) where z is the reparameterized
    latent that `tts.infer` would push through its flow/decoder.
    """
    B, C, T = n2.shape
    assert m_p.shape == (B, C, T) and logs_p.shape == (B, C, T)
    rows = B * C

    nsplit, vmem_limit, stream_budget = _chip_config()

    n2_f = n2.reshape(rows, T)
    mp_f = m_p.reshape(rows, T)        # native dtype on the HBM wire
    lp_f = logs_p.reshape(rows, T)
    z_dtype = n2.dtype

    # Row-tile sizing: 4 streams (n2, m_p, logs_p, z) x 2 pipeline buffers.
    bytes_per_row_step = 2 * T * (n2_f.dtype.itemsize + mp_f.dtype.itemsize
                                  + lp_f.dtype.itemsize
                                  + jnp.dtype(z_dtype).itemsize)
    max_rt = max(ACC_ROWS,
                 (stream_budget // max(bytes_per_row_step, 1))
                 // ACC_ROWS * ACC_ROWS)

    # Guarantee >= ~3 steps per parallel slice when there is enough work, so
    # the DMA/compute/writeback pipeline actually overlaps.
    rows_per_split = pl.cdiv(rows, nsplit)
    if rows_per_split >= 3 * ACC_ROWS:
        rt_target = max(ACC_ROWS, (rows_per_split // 3) // ACC_ROWS * ACC_ROWS)
    else:
        rt_target = _round_up(rows_per_split, ACC_ROWS)
    rt = max(ACC_ROWS, min(max_rt, rt_target))

    nblocks = pl.cdiv(rows, rt)
    steps = pl.cdiv(nblocks, nsplit)

    # Clamp the row-block index: redundant iterations (only possible when
    # nsplit*steps > nblocks) re-process the last block -> z rewrite is
    # idempotent and their stat contribution is masked to 0 in-kernel.
    def row_idx(p, i):
        return (jnp.minimum(p * steps + i, nblocks - 1), 0)

    row_spec = pl.BlockSpec((rt, T), row_idx)                     # T == full dim
    stat_spec = pl.BlockSpec((1, ACC_ROWS, T), lambda p, i: (p, 0, 0))

    log_ns = math.log(noise_scale) if noise_scale > 0 else None

    z_f, sum_part, sumsq_part = pl.pallas_call(
        functools.partial(_cvae_attack_kernel, rows=rows,
                          noise_scale=noise_scale, log_noise_scale=log_ns),
        out_shape=(
            jax.ShapeDtypeStruct((rows, T), z_dtype),
            jax.ShapeDtypeStruct((nsplit, ACC_ROWS, T), jnp.float32),
            jax.ShapeDtypeStruct((nsplit, ACC_ROWS, T), jnp.float32),
        ),
        grid_spec=pltpu.PrefetchScalarGridSpec(
            num_scalar_prefetch=0,
            grid=(nsplit, steps),
            in_specs=[row_spec, row_spec, row_spec],
            out_specs=[row_spec, stat_spec, stat_spec],
        ),
        compiler_params=pltpu.CompilerParams(
            dimension_semantics=("parallel", "arbitrary"),
            vmem_limit_bytes=vmem_limit),
    )(n2_f, mp_f, lp_f)

    z = z_f.reshape(B, C, T)

    # Tiny follow-up reduce over the (nsplit, 8, T) f32 partials.
    n_elems = jnp.float32(rows * T)
    s = jnp.sum(sum_part)
    ss = jnp.sum(sumsq_part)
    mean_n2 = s / n_elems
    var_n2 = ss / n_elems - mean_n2 * mean_n2      # biased, torch unbiased=False
    reg = 100.0 * (jnp.abs(jnp.abs(mean_n2) - 0.01) + jnp.abs(var_n2 - 1.0))

    # noise_1 in the PyTorch forward is always zeros -> no compute needed.
    # TODO(synk): tts.enc_p / tts.infer (text encoder, flow, HiFi-GAN decoder) and
    # asr.compute_loss_and_decoded_output (CTC loss + greedy decode) are opaque
    # external models passed into __init__ — no Pallas equivalent, so the ASR
    # loss contribution is 0 and decoded_output is None.
    loss = jnp.float32(0.0)
    decoded_output = None

    return loss + reg, decoded_output, z


def _reference(n2, m_p, logs_p, noise_scale=NOISE_SCALE):
    z = m_p + n2 * jnp.exp(logs_p) * noise_scale
    mean = jnp.mean(n2)
    var = jnp.mean(jnp.square(n2 - mean))   # biased, matches torch unbiased=False
    reg = 100.0 * (jnp.abs(jnp.abs(mean) - 0.01) + jnp.abs(var - 1.0))
    return reg, z


if __name__ == "__main__":
    key = jax.random.PRNGKey(0)

    def run_case(B, C, T, case_key):
        k1, k2, k3 = jax.random.split(case_key, 3)
        n2 = jax.random.normal(k1, (B, C, T), dtype=jnp.float32)
        # Deterministic synthetic stand-ins for the enc_p outputs (m_p, logs_p).
        m_p = 0.5 * jax.random.normal(k2, (B, C, T), dtype=jnp.float32)
        logs_p = 0.1 * jax.random.normal(k3, (B, C, T), dtype=jnp.float32)

        loss_plus_reg, decoded, z = cvae_attack_forward(n2, m_p, logs_p)
        jax.block_until_ready((loss_plus_reg, z))

        ref_reg, ref_z = _reference(n2, m_p, logs_p)
        np.testing.assert_allclose(np.asarray(z), np.asarray(ref_z),
                                   rtol=1e-5, atol=1e-5)
        # 100x amplified f32 reduction -> summation-order noise ~1e-4; use 1e-3.
        np.testing.assert_allclose(np.asarray(loss_plus_reg), np.asarray(ref_reg),
                                   rtol=1e-3, atol=1e-3)

    ks = jax.random.split(key, 3)
    run_case(2, 16, 128, ks[0])   # aligned shape (batch=2, latent C=16, T=128)
    run_case(2, 12, 100, ks[1])   # ragged T -> full-dim lane block, no padding
    run_case(3, 9, 160, ks[2])    # ragged T + row tail -> in-kernel row masking
    print("KERNEL_OK")
</pallas_src>

<mosaic_0001>
module attributes {stable_mosaic.version = 11 : i64} {
  func.func @_cvae_attack_kernel(%arg0: i32, %arg1: i32, %arg2: memref<8x128xf32, #tpu.memory_space<vmem>>, %arg3: memref<8x128xf32, #tpu.memory_space<vmem>>, %arg4: memref<8x128xf32, #tpu.memory_space<vmem>>, %arg5: memref<8x128xf32, #tpu.memory_space<vmem>>, %arg6: memref<1x8x128xf32, #tpu.memory_space<vmem>>, %arg7: memref<1x8x128xf32, #tpu.memory_space<vmem>>) attributes {dimension_semantics = [#tpu.dimension_semantics<parallel>, #tpu.dimension_semantics<arbitrary>], iteration_bounds = array<i64: 1, 4>, scalar_prefetch = 0 : i64, scratch_operands = 0 : i64, tpu.core_type = #tpu.core_type<tc>, window_params = [{transform_indices = @transform_0, window_bounds = array<i64: 8, 128>}, {transform_indices = @transform_1, window_bounds = array<i64: 8, 128>}, {transform_indices = @transform_2, window_bounds = array<i64: 8, 128>}, {transform_indices = @transform_3, window_bounds = array<i64: 8, 128>}, {transform_indices = @transform_4, window_bounds = array<i64: 1, 8, 128>}, {transform_indices = @transform_5, window_bounds = array<i64: 1, 8, 128>}]} {
    %c0_i32 = arith.constant 0 : i32
    %0 = arith.cmpi eq, %arg1, %c0_i32 : i32
    %1 = arith.extui %0 : i1 to i32
    %c0_i32_0 = arith.constant 0 : i32
    %2 = arith.cmpi ne, %1, %c0_i32_0 : i32
    scf.if %2 {
      %cst_23 = arith.constant 0.000000e+00 : f32
      %38 = vector.broadcast %cst_23 : f32 to vector<1x8x128xf32>
      %c0_24 = arith.constant 0 : index
      %c0_25 = arith.constant 0 : index
      %c0_26 = arith.constant 0 : index
      %39 = vector.load %arg6[%c0_24, %c0_25, %c0_26] : memref<1x8x128xf32, #tpu.memory_space<vmem>>, vector<1x8x128xf32>
      tpu.vector_store %arg6[%c0_24, %c0_25, %c0_26], %38 {strides = array<i32>} : memref<1x8x128xf32, #tpu.memory_space<vmem>>, vector<1x8x128xf32>,
      %cst_27 = arith.constant 0.000000e+00 : f32
      %40 = vector.broadcast %cst_27 : f32 to vector<1x8x128xf32>
      %c0_28 = arith.constant 0 : index
      %c0_29 = arith.constant 0 : index
      %c0_30 = arith.constant 0 : index
      %41 = vector.load %arg7[%c0_28, %c0_29, %c0_30] : memref<1x8x128xf32, #tpu.memory_space<vmem>>, vector<1x8x128xf32>
      tpu.vector_store %arg7[%c0_28, %c0_29, %c0_30], %40 {strides = array<i32>} : memref<1x8x128xf32, #tpu.memory_space<vmem>>, vector<1x8x128xf32>,
    } else {
    }
    %c0 = arith.constant 0 : index
    %c0_1 = arith.constant 0 : index
    %3 = vector.load %arg2[%c0, %c0_1] : memref<8x128xf32, #tpu.memory_space<vmem>>, vector<8x128xf32>
    %c0_2 = arith.constant 0 : index
    %c0_3 = arith.constant 0 : index
    %4 = vector.load %arg3[%c0_2, %c0_3] : memref<8x128xf32, #tpu.memory_space<vmem>>, vector<8x128xf32>
    %c0_4 = arith.constant 0 : index
    %c0_5 = arith.constant 0 : index
    %5 = vector.load %arg4[%c0_4, %c0_5] : memref<8x128xf32, #tpu.memory_space<vmem>>, vector<8x128xf32>
    %cst = arith.constant -1.20397282 : f32
    %6 = vector.broadcast %cst : f32 to vector<8x128xf32>
    %7 = arith.addf %5, %6 : vector<8x128xf32>
    %8 = math.exp %7 : vector<8x128xf32>
    %9 = arith.mulf %3, %8 : vector<8x128xf32>
    %10 = arith.addf %4, %9 : vector<8x128xf32>
    %c0_6 = arith.constant 0 : index
    %c0_7 = arith.constant 0 : index
    %11 = vector.load %arg5[%c0_6, %c0_7] : memref<8x128xf32, #tpu.memory_space<vmem>>, vector<8x128xf32>
    tpu.vector_store %arg5[%c0_6, %c0_7], %10 {strides = array<i32>} : memref<8x128xf32, #tpu.memory_space<vmem>>, vector<8x128xf32>,
    %c4_i32 = arith.constant 4 : i32
    %12 = arith.muli %arg0, %c4_i32 : i32
    %13 = arith.addi %12, %arg1 : i32
    %c8_i32 = arith.constant 8 : i32
    %14 = arith.muli %13, %c8_i32 : i32
    %15 = tpu.iota {dimensions = array<i32: 0>} : vector<8x128xi32>
    %16 = vector.broadcast %14 : i32 to vector<8x128xi32>
    %17 = arith.addi %16, %15 : vector<8x128xi32>
    %c32_i32 = arith.constant 32 : i32
    %18 = vector.broadcast %c32_i32 : i32 to vector<8x128xi32>
    %19 = arith.cmpi slt, %17, %18 : vector<8x128xi32>
    %cst_8 = arith.constant 0.000000e+00 : f32
    %20 = vector.broadcast %cst_8 : f32 to vector<8x128xf32>
    %21 = arith.select %19, %3, %20 : vector<8x128xi1>, vector<8x128xf32>
    %22 = vector.shape_cast %21 : vector<8x128xf32> to vector<1x8x128xf32>
    %c0_9 = arith.constant 0 : index
    %c0_10 = arith.constant 0 : index
    %c0_11 = arith.constant 0 : index
    %23 = vector.load %arg6[%c0_9, %c0_10, %c0_11] : memref<1x8x128xf32, #tpu.memory_space<vmem>>, vector<1x8x128xf32>
    %24 = vector.shape_cast %23 : vector<1x8x128xf32> to vector<8x128xf32>
    %cst_12 = arith.constant dense<0.000000e+00> : vector<8x128xf32>
    %25 = vector.multi_reduction <add>, %22, %cst_12 [0] : vector<1x8x128xf32> to vector<8x128xf32>
    %26 = arith.addf %24, %25 : vector<8x128xf32>
    %c0_13 = arith.constant 0 : index
    %c0_14 = arith.constant 0 : index
    %c0_15 = arith.constant 0 : index
    %27 = vector.load %arg6[%c0_13, %c0_14, %c0_15] : memref<1x8x128xf32, #tpu.memory_space<vmem>>, vector<1x8x128xf32>
    %28 = vector.shape_cast %27 : vector<1x8x128xf32> to vector<8x128xf32>
    %29 = vector.shape_cast %26 : vector<8x128xf32> to vector<1x8x128xf32>
    tpu.vector_store %arg6[%c0_13, %c0_14, %c0_15], %29 {strides = array<i32>} : memref<1x8x128xf32, #tpu.memory_space<vmem>>, vector<1x8x128xf32>,
    %c0_16 = arith.constant 0 : index
    %c0_17 = arith.constant 0 : index
    %c0_18 = arith.constant 0 : index
    %30 = vector.load %arg7[%c0_16, %c0_17, %c0_18] : memref<1x8x128xf32, #tpu.memory_space<vmem>>, vector<1x8x128xf32>
    %31 = vector.shape_cast %30 : vector<1x8x128xf32> to vector<8x128xf32>
    %32 = arith.mulf %22, %22 : vector<1x8x128xf32>
    %cst_19 = arith.constant dense<0.000000e+00> : vector<8x128xf32>
    %33 = vector.multi_reduction <add>, %32, %cst_19 [0] : vector<1x8x128xf32> to vector<8x128xf32>
    %34 = arith.addf %31, %33 : vector<8x128xf32>
    %c0_20 = arith.constant 0 : index
    %c0_21 = arith.constant 0 : index
    %c0_22 = arith.constant 0 : index
    %35 = vector.load %arg7[%c0_20, %c0_21, %c0_22] : memref<1x8x128xf32, #tpu.memory_space<vmem>>, vector<1x8x128xf32>
    %36 = vector.shape_cast %35 : vector<1x8x128xf32> to vector<8x128xf32>
    %37 = vector.shape_cast %34 : vector<8x128xf32> to vector<1x8x128xf32>
    tpu.vector_store %arg7[%c0_20, %c0_21, %c0_22], %37 {strides = array<i32>} : memref<1x8x128xf32, #tpu.memory_space<vmem>>, vector<1x8x128xf32>,
    return
  }
  func.func @transform_0(%arg0: i32, %arg1: i32) -> (i32, i32) {
    %c4_i32 = arith.constant 4 : i32
    %0 = arith.muli %arg0, %c4_i32 : i32
    %1 = arith.addi %0, %arg1 : i32
    %c3_i32 = arith.constant 3 : i32
    %2 = arith.minsi %1, %c3_i32 : i32
    %c0_i32 = arith.constant 0 : i32
    %c0_i32_0 = arith.constant 0 : i32
    return %2, %c0_i32 : i32, i32
  }
  func.func @transform_1(%arg0: i32, %arg1: i32) -> (i32, i32) {
    %c4_i32 = arith.constant 4 : i32
    %0 = arith.muli %arg0, %c4_i32 : i32
    %1 = arith.addi %0, %arg1 : i32
    %c3_i32 = arith.constant 3 : i32
    %2 = arith.minsi %1, %c3_i32 : i32
    %c0_i32 = arith.constant 0 : i32
    %c0_i32_0 = arith.constant 0 : i32
    return %2, %c0_i32 : i32, i32
  }
  func.func @transform_2(%arg0: i32, %arg1: i32) -> (i32, i32) {
    %c4_i32 = arith.constant 4 : i32
    %0 = arith.muli %arg0, %c4_i32 : i32
    %1 = arith.addi %0, %arg1 : i32
    %c3_i32 = arith.constant 3 : i32
    %2 = arith.minsi %1, %c3_i32 : i32
    %c0_i32 = arith.constant 0 : i32
    %c0_i32_0 = arith.constant 0 : i32
    return %2, %c0_i32 : i32, i32
  }
  func.func @transform_3(%arg0: i32, %arg1: i32) -> (i32, i32) {
    %c4_i32 = arith.constant 4 : i32
    %0 = arith.muli %arg0, %c4_i32 : i32
    %1 = arith.addi %0, %arg1 : i32
    %c3_i32 = arith.constant 3 : i32
    %2 = arith.minsi %1, %c3_i32 : i32
    %c0_i32 = arith.constant 0 : i32
    %c0_i32_0 = arith.constant 0 : i32
    return %2, %c0_i32 : i32, i32
  }
  func.func @transform_4(%arg0: i32, %arg1: i32) -> (i32, i32, i32) {
    %c0_i32 = arith.constant 0 : i32
    %c0_i32_0 = arith.constant 0 : i32
    %c0_i32_1 = arith.constant 0 : i32
    return %arg0, %c0_i32, %c0_i32_0 : i32, i32, i32
  }
  func.func @transform_5(%arg0: i32, %arg1: i32) -> (i32, i32, i32) {
    %c0_i32 = arith.constant 0 : i32
    %c0_i32_0 = arith.constant 0 : i32
    %c0_i32_1 = arith.constant 0 : i32
    return %arg0, %c0_i32, %c0_i32_0 : i32, i32, i32
  }
}

</mosaic_0001>

<llo_original>
// kernel: tpu_custom_call.1
$region0: #{tpu_custom_call.1}
  #allocation0 [shape = 'u32[]', space=smem, size = 0x4, offset = 0x4, fixed_abs, tag = 'smem constant byte address 0x4 - core index']
  #allocation1 [shape = 'u32[144,128]{1,0:T(1,128)}', space=vmem, size = 0x12000, scoped, tag = 'internal scratch']
  %s0 = inlined_call_operand.hbm [shape: f32[32,128], index: 0, kind: input, shape index: {}]
  %s1 = inlined_call_operand.hbm [shape: f32[32,128], index: 1, kind: input, shape index: {}]
  %s2 = inlined_call_operand.hbm [shape: f32[32,128], index: 2, kind: input, shape index: {}]
  %s3 = inlined_call_operand.hbm [shape: f32[32,128], index: 3, kind: output, shape index: {0}]
  %s4 = inlined_call_operand.hbm [shape: f32[1,8,128], index: 4, kind: output, shape index: {1}]
  %s5 = inlined_call_operand.hbm [shape: f32[1,8,128], index: 5, kind: output, shape index: {2}]
  %6 = xla_tuple %s3, %s4, %s5
  %s7 = sld [smem:[#allocation0]]
  $region77: #{tpu_custom_call.1} parent=0
    _
  %s9 = ssub.s32 1, %s7
  %s10 = scalar_select 0, %s9, %s7
  $region1: #{tpu_custom_call.1} parent=0
    #allocation2 [shape = 'u8[8192]{0}', space=vmem, size = 0x2000, scoped, tag = 'input window, operand 0']
    #allocation3 [shape = 's32[2]{0}', space=sflag, size = 0x8, scoped, tag = 'scoped memory for tpu_custom_call.1']
    #allocation4 [shape = 's32[2]{0}', space=sflag, size = 0x8, scoped, tag = 'scoped memory for tpu_custom_call.1']
    #allocation5 [shape = 'u8[8192]{0}', space=vmem, size = 0x2000, scoped, tag = 'input window, operand 1']
    #allocation6 [shape = 's32[2]{0}', space=sflag, size = 0x8, scoped, tag = 'scoped memory for tpu_custom_call.1']
    #allocation7 [shape = 'u8[8192]{0}', space=vmem, size = 0x2000, scoped, tag = 'input window, operand 2']
    #allocation8 [shape = 'u8[8192]{0}', space=vmem, size = 0x2000, scoped, tag = 'output window, operand 0']
    #allocation9 [shape = 'u8[4096]{0}', space=vmem, size = 0x1000, scoped, tag = 'output window, operand 1, single buffered']
    #allocation10 [shape = 's32[1]{0}', space=sflag, size = 0x4, scoped, tag = 'scoped memory for tpu_custom_call.1']
    #allocation11 [shape = 'u8[4096]{0}', space=vmem, size = 0x1000, scoped, tag = 'output window, operand 2, single buffered']
    %11 = vsyncpa [#allocation3], 0
    %s12 = scalar_lea.sflag [#allocation3], 1
    %13 = vsyncpa %s12, 0
    %14 = vsyncpa [#allocation6], 0
    %s15 = scalar_lea.sflag [#allocation6], 1
    %16 = vsyncpa %s15, 0
    %17 = vsyncpa [#allocation4], 0
    %s18 = scalar_lea.sflag [#allocation4], 1
    %19 = vsyncpa %s18, 0
    %20 = vsyncpa [#allocation10], 0
    loop: start=0, step=1, limit=6
    $region2: #{tpu_custom_call.1} parent=1 // loop_pre_header
      _
    $region3: #{tpu_custom_call.1} parent=1 // loop_header
      %s22 = sphi 0, %s26
      %p23 = scmp.ge.s32.totalorder %s22, 6
      %s29 = sphi 0, %s41
      %s30 = sphi 0, %s37
      %s31 = sphi 0, %s29
      %s32 = sphi 0, %s30
      %s33 = sphi 0, %s31
      %s34 = sphi 0, %s32
      %s52 = sphi 0, %s54
      %s55 = sphi 0, %s52
      %s56 = sphi 0, %s55
      %s72 = sphi 0, %s56
      %s86 = sphi 0, %s88
      %s89 = sphi 0, %s86
      %s90 = sphi 0, %s89
      %s106 = sphi 0, %s90
      %s120 = sphi 0, %s122
      %s123 = sphi 0, %s120
      %s124 = sphi 0, %s123
      %s140 = sphi 0, %s124
      %s154 = sphi 0, %s156
      %s157 = sphi 0, %s154
      %s158 = sphi 0, %s157
      %s174 = sphi 0, %s158
      %s180 = sphi 0, %s182
      %s183 = sphi 0, %s180
      %s184 = sphi 0, %s183
      %s200 = sphi 0, %s184
      %s206 = sphi 0, %s208
      %s209 = sphi 0, %s206
      %s210 = sphi 0, %s209
      %s226 = sphi 0, %s210
    $region4: #{tpu_custom_call.1} parent=1 // loop_header_branch
      %25 = sbr.rel (%p23) target = $region8
    $region5: #{tpu_custom_call.1} parent=1 // loop_body
      %s27 = ssub.s32 %s22, 1
      %s28 = ssub.s32 %s22, 2
      %s35 = sadd.s32 1, %s30
      %p36 = scmp.ge.s32.totalorder %s35, 4
      %s37 = scalar_select %p36, 0, %s35
      %s38 = sadd.s32 1, %s29
      %s39 = scalar_select %p36, %s38, %s29
      %p40 = scmp.ge.s32.totalorder %s39, 1
      %s41 = scalar_select %p40, 0, %s39
      %s42 = smul.u32 %s29, 4
      %s43 = sadd.s32 %s42, %s30
      %p44 = scmp.lt.s32.totalorder %s43, 3
      %s45 = scalar_select %p44, %s43, 3
      %s46 = smul.u32 %s41, 4
      %s47 = sadd.s32 %s46, %s37
      %p48 = scmp.lt.s32.totalorder %s47, 3
      %s49 = scalar_select %p48, %s47, 3
      %s50 = ssub.s32 %s45, %s49
      %p51 = scmp.eq.s32.totalorder %s50, 0
      %s53 = sadd.s32 %s52, 1
      %s54 = scalar_select %p51, %s52, %s53
      %p57 = pneg %p51
      %p58 = scmp.eq.s32.totalorder %s22, 3
      %p59 = por %p57, %p58
      %p60 = scmp.ne.s32.totalorder %s52, %s55
      %p61 = scmp.eq.s32.totalorder %s22, 0
      %p62 = por %p60, %p61
      %p63 = scmp.ne.s32.totalorder %s52, %s55
      %p64 = scmp.eq.s32.totalorder %s27, 3
      %p65 = por %p63, %p64
      %p66 = scmp.ne.s32.totalorder %s55, %s56
      %p67 = scmp.eq.s32.totalorder %s27, 0
      %p68 = por %p66, %p67
      %p69 = scmp.ne.s32.totalorder %s55, %s56
      %p70 = scmp.eq.s32.totalorder %s28, 3
      %p71 = por %p69, %p70
      %p73 = scmp.ne.s32.totalorder %s56, %s72
      %p74 = scmp.eq.s32.totalorder %s28, 0
      %p75 = por %p73, %p74
      %s76 = smul.u32 %s29, 4
      %s77 = sadd.s32 %s76, %s30
      %p78 = scmp.lt.s32.totalorder %s77, 3
      %s79 = scalar_select %p78, %s77, 3
      %s80 = smul.u32 %s41, 4
      %s81 = sadd.s32 %s80, %s37
      %p82 = scmp.lt.s32.totalorder %s81, 3
      %s83 = scalar_select %p82, %s81, 3
      %s84 = ssub.s32 %s79, %s83
      %p85 = scmp.eq.s32.totalorder %s84, 0
      %s87 = sadd.s32 %s86, 1
      %s88 = scalar_select %p85, %s86, %s87
      %p91 = pneg %p85
      %p92 = scmp.eq.s32.totalorder %s22, 3
      %p93 = por %p91, %p92
      %p94 = scmp.ne.s32.totalorder %s86, %s89
      %p95 = scmp.eq.s32.totalorder %s22, 0
      %p96 = por %p94, %p95
      %p97 = scmp.ne.s32.totalorder %s86, %s89
      %p98 = scmp.eq.s32.totalorder %s27, 3
      %p99 = por %p97, %p98
      %p100 = scmp.ne.s32.totalorder %s89, %s90
      %p101 = scmp.eq.s32.totalorder %s27, 0
      %p102 = por %p100, %p101
      %p103 = scmp.ne.s32.totalorder %s89, %s90
      %p104 = scmp.eq.s32.totalorder %s28, 3
      %p105 = por %p103, %p104
      %p107 = scmp.ne.s32.totalorder %s90, %s106
      %p108 = scmp.eq.s32.totalorder %s28, 0
      %p109 = por %p107, %p108
      %s110 = smul.u32 %s29, 4
      %s111 = sadd.s32 %s110, %s30
      %p112 = scmp.lt.s32.totalorder %s111, 3
      %s113 = scalar_select %p112, %s111, 3
      %s114 = smul.u32 %s41, 4
      %s115 = sadd.s32 %s114, %s37
      %p116 = scmp.lt.s32.totalorder %s115, 3
      %s117 = scalar_select %p116, %s115, 3
      %s118 = ssub.s32 %s113, %s117
      %p119 = scmp.eq.s32.totalorder %s118, 0
      %s121 = sadd.s32 %s120, 1
      %s122 = scalar_select %p119, %s120, %s121
      %p125 = pneg %p119
      %p126 = scmp.eq.s32.totalorder %s22, 3
      %p127 = por %p125, %p126
      %p128 = scmp.ne.s32.totalorder %s120, %s123
      %p129 = scmp.eq.s32.totalorder %s22, 0
      %p130 = por %p128, %p129
      %p131 = scmp.ne.s32.totalorder %s120, %s123
      %p132 = scmp.eq.s32.totalorder %s27, 3
      %p133 = por %p131, %p132
      %p134 = scmp.ne.s32.totalorder %s123, %s124
      %p135 = scmp.eq.s32.totalorder %s27, 0
      %p136 = por %p134, %p135
      %p137 = scmp.ne.s32.totalorder %s123, %s124
      %p138 = scmp.eq.s32.totalorder %s28, 3
      %p139 = por %p137, %p138
      %p141 = scmp.ne.s32.totalorder %s124, %s140
      %p142 = scmp.eq.s32.totalorder %s28, 0
      %p143 = por %p141, %p142
      %s144 = smul.u32 %s29, 4
      %s145 = sadd.s32 %s144, %s30
      %p146 = scmp.lt.s32.totalorder %s145, 3
      %s147 = scalar_select %p146, %s145, 3
      %s148 = smul.u32 %s41, 4
      %s149 = sadd.s32 %s148, %s37
      %p150 = scmp.lt.s32.totalorder %s149, 3
      %s151 = scalar_select %p150, %s149, 3
      %s152 = ssub.s32 %s147, %s151
      %p153 = scmp.eq.s32.totalorder %s152, 0
      %s155 = sadd.s32 %s154, 1
      %s156 = scalar_select %p153, %s154, %s155
      %p159 = pneg %p153
      %p160 = scmp.eq.s32.totalorder %s22, 3
      %p161 = por %p159, %p160
      %p162 = scmp.ne.s32.totalorder %s154, %s157
      %p163 = scmp.eq.s32.totalorder %s22, 0
      %p164 = por %p162, %p163
      %p165 = scmp.ne.s32.totalorder %s154, %s157
      %p166 = scmp.eq.s32.totalorder %s27, 3
      %p167 = por %p165, %p166
      %p168 = scmp.ne.s32.totalorder %s157, %s158
      %p169 = scmp.eq.s32.totalorder %s27, 0
      %p170 = por %p168, %p169
      %p171 = scmp.ne.s32.totalorder %s157, %s158
      %p172 = scmp.eq.s32.totalorder %s28, 3
      %p173 = por %p171, %p172
      %p175 = scmp.ne.s32.totalorder %s158, %s174
      %p176 = scmp.eq.s32.totalorder %s28, 0
      %p177 = por %p175, %p176
      %s178 = ssub.s32 %s29, %s41
      %p179 = scmp.eq.s32.totalorder %s178, 0
      %s181 = sadd.s32 %s180, 1
      %s182 = scalar_select %p179, %s180, %s181
      %p185 = pneg %p179
      %p186 = scmp.eq.s32.totalorder %s22, 3
      %p187 = por %p185, %p186
      %p188 = scmp.ne.s32.totalorder %s180, %s183
      %p189 = scmp.eq.s32.totalorder %s22, 0
      %p190 = por %p188, %p189
      %p191 = scmp.ne.s32.totalorder %s180, %s183
      %p192 = scmp.eq.s32.totalorder %s27, 3
      %p193 = por %p191, %p192
      %p194 = scmp.ne.s32.totalorder %s183, %s184
      %p195 = scmp.eq.s32.totalorder %s27, 0
      %p196 = por %p194, %p195
      %p197 = scmp.ne.s32.totalorder %s183, %s184
      %p198 = scmp.eq.s32.totalorder %s28, 3
      %p199 = por %p197, %p198
      %p201 = scmp.ne.s32.totalorder %s184, %s200
      %p202 = scmp.eq.s32.totalorder %s28, 0
      %p203 = por %p201, %p202
      %s204 = ssub.s32 %s29, %s41
      %p205 = scmp.eq.s32.totalorder %s204, 0
      %s207 = sadd.s32 %s206, 1
      %s208 = scalar_select %p205, %s206, %s207
      %p211 = pneg %p205
      %p212 = scmp.eq.s32.totalorder %s22, 3
      %p213 = por %p211, %p212
      %p214 = scmp.ne.s32.totalorder %s206, %s209
      %p215 = scmp.eq.s32.totalorder %s22, 0
      %p216 = por %p214, %p215
      %p217 = scmp.ne.s32.totalorder %s206, %s209
      %p218 = scmp.eq.s32.totalorder %s27, 3
      %p219 = por %p217, %p218
      %p220 = scmp.ne.s32.totalorder %s209, %s210
      %p221 = scmp.eq.s32.totalorder %s27, 0
      %p222 = por %p220, %p221
      %p223 = scmp.ne.s32.totalorder %s209, %s210
      %p224 = scmp.eq.s32.totalorder %s28, 3
      %p225 = por %p223, %p224
      %p227 = scmp.ne.s32.totalorder %s210, %s226
      %p228 = scmp.eq.s32.totalorder %s28, 0
      %p229 = por %p227, %p228
      %p230 = scmp.le.s32.totalorder 1, %s22
      %p231 = scmp.lt.s32.totalorder %s22, 5
      %p232 = pnand %p230, %p231
      %p233 = pneg %p232
      // Predicated region
      $region9: #{tpu_custom_call.1} parent=5 // pred_check
        _
      $region10: #{tpu_custom_call.1} parent=5 // pred_check_branch
        %235 = sbr.rel (%p232) target = $region12
      $region11: #{tpu_custom_call.1} parent=5 // pred_region
        %s236 = ssub.s32 %s22, 1
      $region12: #{tpu_custom_call.1} parent=5 // pred_fallthru
        _
      %p237 = scmp.lt.s32.totalorder %s22, 4
      // Predicated region
      $region13: #{tpu_custom_call.1} parent=5 // pred_check
        %p238 = pneg %p237
      $region14: #{tpu_custom_call.1} parent=5 // pred_check_branch
        %240 = sbr.rel (%p238) target = $region16
      $region15: #{tpu_custom_call.1} parent=5 // pred_region
        // Predicated region
        $region17: #{tpu_custom_call.1} parent=15 // pred_check
          %p241 = pneg %p62
        $region18: #{tpu_custom_call.1} parent=15 // pred_check_branch
          %243 = sbr.rel (%p241) target = $region20
        $region19: #{tpu_custom_call.1} parent=15 // pred_region
          %s244 = sand.u32 %s52, 1
          %s245 = scalar_lea.sflag [#allocation3], %s244
          %s246 = sand.u32 %s52, 1
          %s247 = smul.addr %s246, 8
          %s248 = scalar_lea.vmem [#allocation2], %s247
          %s249 = smul.u32 %s29, 4
          %s250 = sadd.s32 %s249, %s30
          %p251 = scmp.lt.s32.totalorder %s250, 3
          %s252 = scalar_select %p251, %s250, 3
          %s254 = ssub.s32 128, 128
          %255 = vsyncadd %s245, %s254
          %s256 = smul.addr %s252, 128
          %s257 = scalar_lea.hbm %s0, %s256
          %s259 = sshll.u32 %s248, 4
          %s260 = int_to_ptr.vmem [resolvable:$true] %s259
          %262 = dma.hbm_to_vmem [thread:$0]  %s257, 128, %s260, %s245
        $region20: #{tpu_custom_call.1} parent=15 // pred_fallthru
          _
        // Predicated region
        $region21: #{tpu_custom_call.1} parent=15 // pred_check
          %p263 = pneg %p96
        $region22: #{tpu_custom_call.1} parent=15 // pred_check_branch
          %265 = sbr.rel (%p263) target = $region24
        $region23: #{tpu_custom_call.1} parent=15 // pred_region
          %s266 = sand.u32 %s22, 1
          %s267 = scalar_lea.sflag [#allocation6], %s266
          %s268 = sand.u32 %s86, 1
          %s269 = smul.addr %s268, 8
          %s270 = scalar_lea.vmem [#allocation5], %s269
          %s271 = smul.u32 %s29, 4
          %s272 = sadd.s32 %s271, %s30
          %p273 = scmp.lt.s32.totalorder %s272, 3
          %s274 = scalar_select %p273, %s272, 3
          %s276 = ssub.s32 128, 128
          %277 = vsyncadd %s267, %s276
          %s278 = smul.addr %s274, 128
          %s279 = scalar_lea.hbm %s1, %s278
          %s281 = sshll.u32 %s270, 4
          %s282 = int_to_ptr.vmem [resolvable:$true] %s281
          %284 = dma.hbm_to_vmem [thread:$0]  %s279, 128, %s282, %s267
        $region24: #{tpu_custom_call.1} parent=15 // pred_fallthru
          _
        // Predicated region
        $region25: #{tpu_custom_call.1} parent=15 // pred_check
          %p285 = pneg %p130
        $region26: #{tpu_custom_call.1} parent=15 // pred_check_branch
          %287 = sbr.rel (%p285) target = $region28
        $region27: #{tpu_custom_call.1} parent=15 // pred_region
          %s288 = sand.u32 %s22, 1
          %s289 = scalar_lea.sflag [#allocation6], %s288
          %s290 = sand.u32 %s120, 1
          %s291 = smul.addr %s290, 8
          %s292 = scalar_lea.vmem [#allocation7], %s291
          %s293 = smul.u32 %s29, 4
          %s294 = sadd.s32 %s293, %s30
          %p295 = scmp.lt.s32.totalorder %s294, 3
          %s296 = scalar_select %p295, %s294, 3
          %s298 = ssub.s32 128, 128
          %299 = vsyncadd %s289, %s298
          %s300 = smul.addr %s296, 128
          %s301 = scalar_lea.hbm %s2, %s300
          %s303 = sshll.u32 %s292, 4
          %s304 = int_to_ptr.vmem [resolvable:$true] %s303
          %306 = dma.hbm_to_vmem [thread:$0]  %s301, 128, %s304, %s289
        $region28: #{tpu_custom_call.1} parent=15 // pred_fallthru
          _
      $region16: #{tpu_custom_call.1} parent=5 // pred_fallthru
        _
      %p307 = scmp.le.s32.totalorder 1, %s22
      %p308 = scmp.lt.s32.totalorder %s22, 5
      %p309 = pnand %p307, %p308
      %p310 = pneg %p309
      // Predicated region
      $region29: #{tpu_custom_call.1} parent=5 // pred_check
        _
      $region30: #{tpu_custom_call.1} parent=5 // pred_check_branch
        %312 = sbr.rel (%p309) target = $region32
      $region31: #{tpu_custom_call.1} parent=5 // pred_region
        %s313 = ssub.s32 %s22, 1
        %s314 = sand.u32 %s55, 1
        %s315 = scalar_lea.sflag [#allocation3], %s314
        %s316 = sand.u32 %s55, 1
        %s317 = smul.addr %s316, 8
        %s318 = scalar_lea.vmem [#allocation2], %s317
        // Predicated region
        $region33: #{tpu_custom_call.1} parent=31 // pred_check
          %p319 = pneg %p68
        $region34: #{tpu_custom_call.1} parent=31 // pred_check_branch
          %321 = sbr.rel (%p319) target = $region36
        $region35: #{tpu_custom_call.1} parent=31 // pred_region
          %322 = dma.done %s315, 128
        $region36: #{tpu_custom_call.1} parent=31 // pred_fallthru
          _
        %s323 = sand.u32 %s27, 1
        %s324 = scalar_lea.sflag [#allocation6], %s323
        %s325 = sand.u32 %s89, 1
        %s326 = smul.addr %s325, 8
        %s327 = scalar_lea.vmem [#allocation5], %s326
        // Predicated region
        $region37: #{tpu_custom_call.1} parent=31 // pred_check
          %p328 = pneg %p102
        $region38: #{tpu_custom_call.1} parent=31 // pred_check_branch
          %330 = sbr.rel (%p328) target = $region40
        $region39: #{tpu_custom_call.1} parent=31 // pred_region
          %331 = dma.done %s324, 128
        $region40: #{tpu_custom_call.1} parent=31 // pred_fallthru
          _
        %s332 = sand.u32 %s27, 1
        %s333 = scalar_lea.sflag [#allocation6], %s332
        %s334 = sand.u32 %s123, 1
        %s335 = smul.addr %s334, 8
        %s336 = scalar_lea.vmem [#allocation7], %s335
        // Predicated region
        $region41: #{tpu_custom_call.1} parent=31 // pred_check
          %p337 = pneg %p136
        $region42: #{tpu_custom_call.1} parent=31 // pred_check_branch
          %339 = sbr.rel (%p337) target = $region44
        $region43: #{tpu_custom_call.1} parent=31 // pred_region
          %340 = dma.done %s333, 128
        $region44: #{tpu_custom_call.1} parent=31 // pred_fallthru
          _
        %s341 = sand.u32 %s55, 1
        %s342 = scalar_lea.sflag [#allocation3], %s341
        %s343 = sand.u32 %s55, 1
        %s344 = smul.addr %s343, 8
        %s345 = scalar_lea.vmem [#allocation2], %s344
        %p346 = pneg %p68
        %p347 = pneg %p65
        %s348 = sand.u32 %s27, 1
        %s349 = scalar_lea.sflag [#allocation6], %s348
        %s350 = sand.u32 %s89, 1
        %s351 = smul.addr %s350, 8
        %s352 = scalar_lea.vmem [#allocation5], %s351
        %p353 = pneg %p102
        %p354 = pneg %p99
        %s355 = sand.u32 %s27, 1
        %s356 = scalar_lea.sflag [#allocation6], %s355
        %s357 = sand.u32 %s123, 1
        %s358 = smul.addr %s357, 8
        %s359 = scalar_lea.vmem [#allocation7], %s358
        %p360 = pneg %p136
        %p361 = pneg %p133
        %p362 = pneg %p170
        %p363 = pneg %p167
        %s364 = sand.u32 %s157, 1
        %s365 = scalar_lea.sflag [#allocation4], %s364
        %s366 = sand.u32 %s157, 1
        %s367 = smul.addr %s366, 8
        %s368 = scalar_lea.vmem [#allocation8], %s367
        %p369 = pneg %p196
        %p370 = pneg %p193
        %p371 = pneg %p222
        %p372 = pneg %p219
        %s373 = smul.u32 %s31, 4
        %s374 = sadd.s32 %s373, %s32
        %p375 = scmp.lt.s32.totalorder %s374, 3
        %s376 = scalar_select %p375, %s374, 3
        %s377 = smul.u32 %s31, 4
        %s378 = sadd.s32 %s377, %s32
        %p379 = scmp.lt.s32.totalorder %s378, 3
        %s380 = scalar_select %p379, %s378, 3
        %s381 = smul.u32 %s31, 4
        %s382 = sadd.s32 %s381, %s32
        %p383 = scmp.lt.s32.totalorder %s382, 3
        %s384 = scalar_select %p383, %s382, 3
        %s385 = smul.u32 %s31, 4
        %s386 = sadd.s32 %s385, %s32
        %p387 = scmp.lt.s32.totalorder %s386, 3
        %s388 = scalar_select %p387, %s386, 3
        %p389 = scmp.eq.s32.totalorder %s32, 0
        // Predicated region
        $region45: #{tpu_custom_call.1} parent=31 // pred_check
          %p390 = pneg %p389
        $region46: #{tpu_custom_call.1} parent=31 // pred_check_branch
          %392 = sbr.rel (%p390) target = $region48
        $region47: #{tpu_custom_call.1} parent=31 // pred_region
          %393 = vst [vmem:[#allocation9] sm:$0xff] 0.0
          %394 = vst [vmem:[#allocation11] sm:$0xff] 0.0
        $region48: #{tpu_custom_call.1} parent=31 // pred_fallthru
          _
        %v395 = vld [vmem:[%s318] sm:$0xff]
        %v396 = vld [vmem:[%s327] sm:$0xff]
        %v397 = vld [vmem:[%s336] sm:$0xff]
        %v398 = vadd.f32 %v397, -1.2039728
        %v399 = vmul.f32 %v398, 1.442695
        %v400 = vpow.pop %v399
        %v401 = vmul.f32 %v395, %v400
        %v402 = vadd.f32 %v396, %v401
        %403 = vst [vmem:[%s368] sm:$0xff] %v402
        %s404 = smul.u32 %s31, 4
        %s405 = sadd.s32 %s404, %s32
        %s406 = smul.u32 %s405, 8
        %v407 = vlaneseq
        %v408 = vshrl.u32 %v407, 7
        %v409 = vstv %s406
        %v410 = vadd.s32 %v409, %v408
        %vm411 = vcmp.lt.s32.totalorder %v410, 32
        %v412 = vsel %vm411, %v395, 0.0
        %v413 = vld [vmem:[#allocation9] sm:$0xff]
        %v414 = vadd.f32 %v412, 0.0
        %v415 = vadd.f32 %v413, %v414
        %416 = vst [vmem:[#allocation9] sm:$0xff] %v415
        %v417 = vld [vmem:[#allocation11] sm:$0xff]
        %v418 = vmul.f32 %v412, %v412
        %v419 = vadd.f32 %v418, 0.0
        %v420 = vadd.f32 %v417, %v419
        %421 = vst [vmem:[#allocation11] sm:$0xff] %v420
        %s422 = sand.u32 %s157, 1
        %s423 = scalar_lea.sflag [#allocation4], %s422
        %s424 = sand.u32 %s157, 1
        %s425 = smul.addr %s424, 8
        %s426 = scalar_lea.vmem [#allocation8], %s425
        // Predicated region
        $region49: #{tpu_custom_call.1} parent=31 // pred_check
          %p427 = pneg %p167
        $region50: #{tpu_custom_call.1} parent=31 // pred_check_branch
          %429 = sbr.rel (%p427) target = $region52
        $region51: #{tpu_custom_call.1} parent=31 // pred_region
          %s430 = smul.u32 %s31, 4
          %s431 = sadd.s32 %s430, %s32
          %p432 = scmp.lt.s32.totalorder %s431, 3
          %s433 = scalar_select %p432, %s431, 3
          %s435 = ssub.s32 128, 128
          %436 = vsyncadd %s423, %s435
          %s437 = smul.addr %s433, 128
          %s438 = scalar_lea.hbm %s3, %s437
          %s440 = sshll.u32 %s426, 4
          %s441 = int_to_ptr.vmem [resolvable:$true] %s440
          %443 = dma.vmem_to_hbm [thread:$0]  %s441, 128, %s438, %s423
        $region52: #{tpu_custom_call.1} parent=31 // pred_fallthru
          _
        // Predicated region
        $region53: #{tpu_custom_call.1} parent=31 // pred_check
          %p444 = pneg %p193
        $region54: #{tpu_custom_call.1} parent=31 // pred_check_branch
          %446 = sbr.rel (%p444) target = $region56
        $region55: #{tpu_custom_call.1} parent=31 // pred_region
          %s448 = ssub.s32 128, 128
          %449 = vsyncadd [#allocation10], %s448
          %s450 = smul.addr %s31, 128
          %s451 = scalar_lea.hbm %s4, %s450
          %s453 = sshll.u32 [#allocation9], 4
          %s454 = int_to_ptr.vmem [resolvable:$true] %s453
          %456 = dma.vmem_to_hbm [thread:$0]  %s454, 128, %s451, [#allocation10]
        $region56: #{tpu_custom_call.1} parent=31 // pred_fallthru
          _
        // Predicated region
        $region57: #{tpu_custom_call.1} parent=31 // pred_check
          %p457 = pneg %p219
        $region58: #{tpu_custom_call.1} parent=31 // pred_check_branch
          %459 = sbr.rel (%p457) target = $region60
        $region59: #{tpu_custom_call.1} parent=31 // pred_region
          %s461 = ssub.s32 128, 128
          %462 = vsyncadd [#allocation10], %s461
          %s463 = smul.addr %s31, 128
          %s464 = scalar_lea.hbm %s5, %s463
          %s466 = sshll.u32 [#allocation11], 4
          %s467 = int_to_ptr.vmem [resolvable:$true] %s466
          %469 = dma.vmem_to_hbm [thread:$0]  %s467, 128, %s464, [#allocation10]
        $region60: #{tpu_custom_call.1} parent=31 // pred_fallthru
          _
        // Predicated region
        $region61: #{tpu_custom_call.1} parent=31 // pred_check
          %p470 = pneg %p193
        $region62: #{tpu_custom_call.1} parent=31 // pred_check_branch
          %472 = sbr.rel (%p470) target = $region64
        $region63: #{tpu_custom_call.1} parent=31 // pred_region
          %473 = dma.done [#allocation10], 128
        $region64: #{tpu_custom_call.1} parent=31 // pred_fallthru
          _
        // Predicated region
        $region65: #{tpu_custom_call.1} parent=31 // pred_check
          %p474 = pneg %p219
        $region66: #{tpu_custom_call.1} parent=31 // pred_check_branch
          %476 = sbr.rel (%p474) target = $region68
        $region67: #{tpu_custom_call.1} parent=31 // pred_region
          %477 = dma.done [#allocation10], 128
        $region68: #{tpu_custom_call.1} parent=31 // pred_fallthru
          _
      $region32: #{tpu_custom_call.1} parent=5 // pred_fallthru
        _
      %p478 = scmp.le.s32.totalorder 2, %s22
      // Predicated region
      $region69: #{tpu_custom_call.1} parent=5 // pred_check
        %p479 = pneg %p478
      $region70: #{tpu_custom_call.1} parent=5 // pred_check_branch
        %481 = sbr.rel (%p479) target = $region72
      $region71: #{tpu_custom_call.1} parent=5 // pred_region
        %s482 = ssub.s32 %s22, 2
        // Predicated region
        $region73: #{tpu_custom_call.1} parent=71 // pred_check
          %p483 = pneg %p173
        $region74: #{tpu_custom_call.1} parent=71 // pred_check_branch
          %485 = sbr.rel (%p483) target = $region76
        $region75: #{tpu_custom_call.1} parent=71 // pred_region
          %s486 = sand.u32 %s158, 1
          %s487 = scalar_lea.sflag [#allocation4], %s486
          %s488 = sand.u32 %s158, 1
          %s489 = smul.addr %s488, 8
          %s490 = scalar_lea.vmem [#allocation8], %s489
          %491 = dma.done %s487, 128
        $region76: #{tpu_custom_call.1} parent=71 // pred_fallthru
          _
      $region72: #{tpu_custom_call.1} parent=5 // pred_fallthru
        _
    $region6: #{tpu_custom_call.1} parent=1 // loop_footer
      %s26 = sadd.s32 1, %s22
    $region7: #{tpu_custom_call.1} parent=1 // loop_footer_branch
      %21 = sbr.rel target = $region3
    $region8: #{tpu_custom_call.1} parent=1 // loop_exit
      _
    %492 = vsyncpa [#allocation3], 1
    %s493 = scalar_lea.sflag [#allocation3], 1
    %494 = vsyncpa %s493, 1
    %495 = vsyncpa [#allocation6], 1
    %s496 = scalar_lea.sflag [#allocation6], 1
    %497 = vsyncpa %s496, 1
    %498 = vsyncpa [#allocation4], 1
    %s499 = scalar_lea.sflag [#allocation4], 1
    %500 = vsyncpa %s499, 1
    %501 = vsyncpa [#allocation10], 1

</llo_original>
